<compile_context>
chip_gen: v5e
topology: v5e:2x2
jax: 0.10.0
libtpu: 0.0.40
codegen_flags: <defaults>
</compile_context>

<pallas_src>
import functools

import jax
import jax.numpy as jnp
from jax.experimental import pallas as pl
from jax.experimental.pallas import tpu as pltpu


def _gru_kernel(x_ref, h0_ref, wih_ref, whh_ref, bpack_ref, wlin_ref,
                logp_ref, hn_ref,
                girz_s, gin_s,
                *, seq_len, hidden_size, output_size):
    T, H, O = seq_len, hidden_size, output_size
    bt = h0_ref.shape[0]          # batch tile (names processed by this program)
    I = x_ref.shape[2]

    # ---- Unpack packed biases (once, off the recurrent chain) ---------------
    # row 0: b_ih + [b_hh_r, b_hh_z, 0]   (PyTorch gate order r, z, n)
    # row 1: b_hh_n (first H lanes)
    # row 2: b_lin  (first O lanes)
    bcomb = bpack_ref[0:1, 0:3 * H]                                     # (1, 3H)
    bhn = bpack_ref[1:2, 0:H]                                           # (1, H)
    blin = bpack_ref[2:3, 0:O]                                          # (1, O)

    # ---- Prologue: input projection for ALL timesteps, one bf16 MXU matmul --
    # x arrives time-major (T, bt, I); merging the leading dims keeps each
    # step's rows contiguous (row t*bt + b), and bt==8 keeps the merge a
    # layout no-op (sublane-tile aligned).
    x2 = x_ref[...].reshape(T * bt, I).astype(jnp.bfloat16)
    gi = jnp.dot(x2, wih_ref[...], preferred_element_type=jnp.float32) + bcomb
    # Split gate columns ONCE; per-step reads below are first-axis loads.
    girz_s[...] = gi[:, 0:2 * H].reshape(T, bt, 2 * H)                  # r|z
    gin_s[...] = gi[:, 2 * H:3 * H].reshape(T, bt, H)                   # n

    whh = whh_ref[...]                                                  # (H, 3H) bf16

    # ---- Recurrence: unrolled in-kernel loop, h carried in vregs -------------
    def step(t, h):
        gh = jnp.dot(h.astype(jnp.bfloat16), whh,
                     preferred_element_type=jnp.float32)                # (bt, 3H)
        rz = jax.nn.sigmoid(girz_s[t] + gh[:, 0:2 * H])                 # one EUP call
        r = rz[:, 0:H]
        z = rz[:, H:2 * H]                                              # off critical path
        n = jnp.tanh(gin_s[t] + r * (gh[:, 2 * H:3 * H] + bhn))
        return (1.0 - z) * n + z * h

    h0 = h0_ref[...].astype(jnp.float32)                                # (bt, H)
    h_last = jax.lax.fori_loop(0, T, step, h0, unroll=True)

    # ---- Epilogue: h_n and log_softmax(Linear(h_n)), f32 ---------------------
    hn_ref[...] = h_last.astype(hn_ref.dtype)
    logits = jnp.dot(h_last, wlin_ref[...],
                     preferred_element_type=jnp.float32) + blin
    m = jnp.max(logits, axis=-1, keepdims=True)
    shifted = logits - m
    lse = jnp.log(jnp.sum(jnp.exp(shifted), axis=-1, keepdims=True))
    logp_ref[...] = (shifted - lse).astype(logp_ref.dtype)


def gru_forward_batched(x, h0, raw_params, *, batch_tile=8):
    """Batched forward. x: (B, T, I), h0: (B, H).

    Each row b is exactly GRU.forward(x[b], h0[b]) of the PyTorch module.
    Returns (log_probs (B, O), h_n (B, H)).
    """
    B, T, I = x.shape
    H = h0.shape[-1]
    w_ih, w_hh, b_ih, b_hh, w_lin, b_lin = raw_params
    O = w_lin.shape[0]

    bt = batch_tile
    B_pad = pl.cdiv(B, bt) * bt
    pad = B_pad - B
    if pad:
        x = jnp.concatenate([x, jnp.zeros((pad, T, I), x.dtype)], axis=0)
        h0 = jnp.concatenate([h0, jnp.zeros((pad, H), h0.dtype)], axis=0)

    # Time-major layout so per-step rows are contiguous inside the kernel.
    x_tm = jnp.transpose(x, (1, 0, 2))                    # (T, B_pad, I)

    # Kernel-friendly parameter layouts (constant-fold under jit for fixed
    # params). Matmul operands bf16; biases stay f32.
    wih = w_ih.T.astype(jnp.bfloat16)                     # (I, 3H)
    whh = w_hh.T.astype(jnp.bfloat16)                     # (H, 3H)  columns r|z|n
    wlin = w_lin.T.astype(jnp.float32)                    # (H, O)

    # Pre-fold b_ih + b_hh for r/z; n keeps only b_ih here (b_hh_n must stay
    # inside the r-gated term per PyTorch GRU semantics).
    bcomb = b_ih + jnp.concatenate(
        [b_hh[0:2 * H], jnp.zeros((H,), b_hh.dtype)])
    W = max(3 * H, O)

    def _row(v):
        return jnp.pad(v, (0, W - v.shape[0]))[None, :]

    b_pack = jnp.concatenate(
        [_row(bcomb), _row(b_hh[2 * H:3 * H]), _row(b_lin)],
        axis=0).astype(jnp.float32)                       # (3, W)

    nb = B_pad // bt
    kernel = functools.partial(_gru_kernel, seq_len=T, hidden_size=H,
                               output_size=O)

    logp, hn = pl.pallas_call(
        kernel,
        out_shape=(
            jax.ShapeDtypeStruct((B_pad, O), jnp.float32),   # log-probs
            jax.ShapeDtypeStruct((B_pad, H), jnp.float32),   # h_n
        ),
        grid_spec=pltpu.PrefetchScalarGridSpec(
            num_scalar_prefetch=0,
            grid=(nb,),                                      # parallel over batch tiles
            in_specs=[
                pl.BlockSpec((T, bt, I), lambda b: (0, b, 0)),   # x (time-major)
                pl.BlockSpec((bt, H), lambda b: (b, 0)),          # h0
                pl.BlockSpec((I, 3 * H), lambda b: (0, 0)),       # W_ih^T (bf16)
                pl.BlockSpec((H, 3 * H), lambda b: (0, 0)),       # W_hh^T (bf16, fused)
                pl.BlockSpec((3, W), lambda b: (0, 0)),           # packed biases
                pl.BlockSpec((H, O), lambda b: (0, 0)),           # W_lin^T
            ],
            out_specs=(
                pl.BlockSpec((bt, O), lambda b: (b, 0)),
                pl.BlockSpec((bt, H), lambda b: (b, 0)),
            ),
            scratch_shapes=[
                pltpu.VMEM((T, bt, 2 * H), jnp.float32),   # gi_{r|z}, all steps
                pltpu.VMEM((T, bt, H), jnp.float32),       # gi_n,    all steps
            ],
        ),
        compiler_params=pltpu.CompilerParams(
            dimension_semantics=("parallel",)),
    )(x_tm, h0, wih, whh, b_pack, wlin)

    return logp[:B], hn[:B]


def gru_forward(x, h0, raw_params):
    """Single-name forward matching the PyTorch module.

    x: (seq_len, input_size), h0: (1, hidden_size) (or (1, 1, hidden_size)).
    Returns (log_probs (1, output_size), h_n (1, hidden_size)).
    """
    h0_flat = h0.reshape(1, -1)
    logp, hn = gru_forward_batched(x[None], h0_flat, raw_params)
    return logp, hn


def init_params(key, input_size, hidden_size, output_size):
    """Deterministic synthetic parameters in native PyTorch shapes."""
    ks = jax.random.split(key, 6)
    s = 0.1
    w_ih = jax.random.normal(ks[0], (3 * hidden_size, input_size), jnp.float32) * s
    w_hh = jax.random.normal(ks[1], (3 * hidden_size, hidden_size), jnp.float32) * s
    b_ih = jax.random.normal(ks[2], (3 * hidden_size,), jnp.float32) * s
    b_hh = jax.random.normal(ks[3], (3 * hidden_size,), jnp.float32) * s
    w_lin = jax.random.normal(ks[4], (output_size, hidden_size), jnp.float32) * s
    b_lin = jax.random.normal(ks[5], (output_size,), jnp.float32) * s
    return (w_ih, w_hh, b_ih, b_hh, w_lin, b_lin)


def _ref_forward(x, h0, raw_params):
    """Plain-JAX reference of the PyTorch forward (single name)."""
    w_ih, w_hh, b_ih, b_hh, w_lin, b_lin = raw_params
    H = h0.shape[-1]
    h = h0
    for t in range(x.shape[0]):
        xt = x[t:t + 1]
        gi = xt @ w_ih.T + b_ih
        gh = h @ w_hh.T + b_hh
        r = jax.nn.sigmoid(gi[:, :H] + gh[:, :H])
        z = jax.nn.sigmoid(gi[:, H:2 * H] + gh[:, H:2 * H])
        n = jnp.tanh(gi[:, 2 * H:] + r * gh[:, 2 * H:])
        h = (1.0 - z) * n + z * h
    logits = h @ w_lin.T + b_lin
    return jax.nn.log_softmax(logits, axis=-1), h


if __name__ == "__main__":
    # Small shapes consistent with the name-classification GRU.
    seq_len, input_size, hidden_size, output_size = 8, 32, 32, 16
    batch = 2

    key = jax.random.PRNGKey(0)
    k_x, k_p = jax.random.split(key)

    x = jax.random.normal(k_x, (batch, seq_len, input_size), jnp.float32)
    h0 = jnp.zeros((batch, hidden_size), jnp.float32)   # GRU.inithidden() per name
    params = init_params(k_p, input_size, hidden_size, output_size)

    # Batched kernel call (2 names per invocation).
    logp, hn = gru_forward_batched(x, h0, params)
    jax.block_until_ready((logp, hn))

    assert logp.shape == (batch, output_size)
    assert hn.shape == (batch, hidden_size)

    for b in range(batch):
        ref_logp, ref_hn = _ref_forward(x[b], h0[b:b + 1], params)
        assert jnp.allclose(logp[b:b + 1], ref_logp, atol=2e-2, rtol=2e-2), \
            f"log-prob mismatch for name {b}"
        assert jnp.allclose(hn[b:b + 1], ref_hn, atol=2e-2, rtol=2e-2), \
            f"hidden-state mismatch for name {b}"

    # Single-name path (exact PyTorch-module signature semantics).
    logp1, hn1 = gru_forward(x[0], h0[0:1], params)
    jax.block_until_ready((logp1, hn1))
    ref_logp1, ref_hn1 = _ref_forward(x[0], h0[0:1], params)
    assert logp1.shape == (1, output_size) and hn1.shape == (1, hidden_size)
    assert jnp.allclose(logp1, ref_logp1, atol=2e-2, rtol=2e-2)
    assert jnp.allclose(hn1, ref_hn1, atol=2e-2, rtol=2e-2)

    print("KERNEL_OK")
</pallas_src>

<mosaic_0001>
module attributes {stable_mosaic.version = 11 : i64} {
  func.func @_gru_kernel(%arg0: i32, %arg1: memref<8x8x32xf32, #tpu.memory_space<vmem>>, %arg2: memref<8x32xf32, #tpu.memory_space<vmem>>, %arg3: memref<32x96xbf16, #tpu.memory_space<vmem>>, %arg4: memref<32x96xbf16, #tpu.memory_space<vmem>>, %arg5: memref<3x96xf32, #tpu.memory_space<vmem>>, %arg6: memref<32x16xf32, #tpu.memory_space<vmem>>, %arg7: memref<8x16xf32, #tpu.memory_space<vmem>>, %arg8: memref<8x32xf32, #tpu.memory_space<vmem>>, %arg9: memref<8x8x64xf32, #tpu.memory_space<vmem>>, %arg10: memref<8x8x32xf32, #tpu.memory_space<vmem>>) attributes {dimension_semantics = [#tpu.dimension_semantics<parallel>], iteration_bounds = array<i64: 1>, scalar_prefetch = 0 : i64, scratch_operands = 2 : i64, tpu.core_type = #tpu.core_type<tc>, window_params = [{transform_indices = @transform_0, window_bounds = array<i64: 8, 8, 32>}, {transform_indices = @transform_1, window_bounds = array<i64: 8, 32>}, {pipeline_mode = #tpu.pipeline_mode<synchronous>, transform_indices = @transform_2, window_bounds = array<i64: 32, 96>}, {pipeline_mode = #tpu.pipeline_mode<synchronous>, transform_indices = @transform_3, window_bounds = array<i64: 32, 96>}, {pipeline_mode = #tpu.pipeline_mode<synchronous>, transform_indices = @transform_4, window_bounds = array<i64: 3, 96>}, {pipeline_mode = #tpu.pipeline_mode<synchronous>, transform_indices = @transform_5, window_bounds = array<i64: 32, 16>}, {transform_indices = @transform_6, window_bounds = array<i64: 8, 16>}, {transform_indices = @transform_7, window_bounds = array<i64: 8, 32>}]} {
    %c0 = arith.constant 0 : index
    %c0_0 = arith.constant 0 : index
    %0 = vector.load %arg5[%c0, %c0_0] : memref<3x96xf32, #tpu.memory_space<vmem>>, vector<1x96xf32>
    %c1 = arith.constant 1 : index
    %c0_1 = arith.constant 0 : index
    %1 = vector.load %arg5[%c1, %c0_1] : memref<3x96xf32, #tpu.memory_space<vmem>>, vector<1x32xf32>
    %c2 = arith.constant 2 : index
    %c0_2 = arith.constant 0 : index
    %2 = vector.load %arg5[%c2, %c0_2] : memref<3x96xf32, #tpu.memory_space<vmem>>, vector<1x16xf32>
    %c0_3 = arith.constant 0 : index
    %c0_4 = arith.constant 0 : index
    %c0_5 = arith.constant 0 : index
    %3 = vector.load %arg1[%c0_3, %c0_4, %c0_5] : memref<8x8x32xf32, #tpu.memory_space<vmem>>, vector<8x8x32xf32>
    %4 = vector.shape_cast %3 : vector<8x8x32xf32> to vector<64x32xf32>
    %5 = arith.truncf %4 : vector<64x32xf32> to vector<64x32xbf16>
    %c0_6 = arith.constant 0 : index
    %c0_7 = arith.constant 0 : index
    %6 = vector.load %arg3[%c0_6, %c0_7] : memref<32x96xbf16, #tpu.memory_space<vmem>>, vector<32x96xbf16>
    %cst = arith.constant dense<0.000000e+00> : vector<64x96xf32>
    %7 = tpu.matmul %5, %6, %cst {dimension_numbers = #tpu.dot_dimension_numbers<[1], [0], [0], [1], [0, 0, 1, 1], [], []>} : vector<64x32xbf16>, vector<32x96xbf16>, vector<64x96xf32> -> vector<64x96xf32>
    %8 = vector.broadcast %0 : vector<1x96xf32> to vector<64x96xf32>
    %9 = arith.addf %7, %8 : vector<64x96xf32>
    %10 = vector.extract_strided_slice %9 {offsets = [0, 0], sizes = [64, 64], strides = [1, 1]} : vector<64x96xf32> to vector<64x64xf32>
    %11 = vector.shape_cast %10 : vector<64x64xf32> to vector<8x8x64xf32>
    %c0_8 = arith.constant 0 : index
    %c0_9 = arith.constant 0 : index
    %c0_10 = arith.constant 0 : index
    %12 = vector.load %arg9[%c0_8, %c0_9, %c0_10] : memref<8x8x64xf32, #tpu.memory_space<vmem>>, vector<8x8x64xf32>
    tpu.vector_store %arg9[%c0_8, %c0_9, %c0_10], %11 {strides = array<i32>} : memref<8x8x64xf32, #tpu.memory_space<vmem>>, vector<8x8x64xf32>,
    %13 = vector.extract_strided_slice %9 {offsets = [0, 64], sizes = [64, 32], strides = [1, 1]} : vector<64x96xf32> to vector<64x32xf32>
    %14 = vector.shape_cast %13 : vector<64x32xf32> to vector<8x8x32xf32>
    %c0_11 = arith.constant 0 : index
    %c0_12 = arith.constant 0 : index
    %c0_13 = arith.constant 0 : index
    %15 = vector.load %arg10[%c0_11, %c0_12, %c0_13] : memref<8x8x32xf32, #tpu.memory_space<vmem>>, vector<8x8x32xf32>
    tpu.vector_store %arg10[%c0_11, %c0_12, %c0_13], %14 {strides = array<i32>} : memref<8x8x32xf32, #tpu.memory_space<vmem>>, vector<8x8x32xf32>,
    %c0_14 = arith.constant 0 : index
    %c0_15 = arith.constant 0 : index
    %16 = vector.load %arg4[%c0_14, %c0_15] : memref<32x96xbf16, #tpu.memory_space<vmem>>, vector<32x96xbf16>
    %c0_16 = arith.constant 0 : index
    %c0_17 = arith.constant 0 : index
    %17 = vector.load %arg2[%c0_16, %c0_17] : memref<8x32xf32, #tpu.memory_space<vmem>>, vector<8x32xf32>
    %c0_i32 = arith.constant 0 : i32
    %18 = arith.truncf %17 : vector<8x32xf32> to vector<8x32xbf16>
    %cst_18 = arith.constant dense<0.000000e+00> : vector<8x96xf32>
    %19 = tpu.matmul %18, %16, %cst_18 {dimension_numbers = #tpu.dot_dimension_numbers<[1], [0], [0], [1], [0, 0, 1, 1], [], []>} : vector<8x32xbf16>, vector<32x96xbf16>, vector<8x96xf32> -> vector<8x96xf32>
    %20 = arith.index_cast %c0_i32 : i32 to index
    %c0_19 = arith.constant 0 : index
    %c0_20 = arith.constant 0 : index
    %21 = vector.load %arg9[%20, %c0_19, %c0_20] : memref<8x8x64xf32, #tpu.memory_space<vmem>>, vector<1x8x64xf32>
    %22 = vector.shape_cast %21 : vector<1x8x64xf32> to vector<8x64xf32>
    %23 = vector.extract_strided_slice %19 {offsets = [0, 0], sizes = [8, 64], strides = [1, 1]} : vector<8x96xf32> to vector<8x64xf32>
    %24 = arith.addf %22, %23 : vector<8x64xf32>
    %25 = arith.negf %24 : vector<8x64xf32>
    %26 = math.exp %25 : vector<8x64xf32>
    %cst_21 = arith.constant 1.000000e+00 : f32
    %27 = vector.broadcast %cst_21 : f32 to vector<8x64xf32>
    %28 = arith.addf %27, %26 : vector<8x64xf32>
    %29 = arith.divf %27, %28 : vector<8x64xf32>
    %30 = vector.extract_strided_slice %29 {offsets = [0, 0], sizes = [8, 32], strides = [1, 1]} : vector<8x64xf32> to vector<8x32xf32>
    %31 = vector.extract_strided_slice %29 {offsets = [0, 32], sizes = [8, 32], strides = [1, 1]} : vector<8x64xf32> to vector<8x32xf32>
    %32 = arith.index_cast %c0_i32 : i32 to index
    %c0_22 = arith.constant 0 : index
    %c0_23 = arith.constant 0 : index
    %33 = vector.load %arg10[%32, %c0_22, %c0_23] : memref<8x8x32xf32, #tpu.memory_space<vmem>>, vector<1x8x32xf32>
    %34 = vector.shape_cast %33 : vector<1x8x32xf32> to vector<8x32xf32>
    %35 = vector.extract_strided_slice %19 {offsets = [0, 64], sizes = [8, 32], strides = [1, 1]} : vector<8x96xf32> to vector<8x32xf32>
    %36 = vector.broadcast %1 : vector<1x32xf32> to vector<8x32xf32>
    %37 = arith.addf %35, %36 : vector<8x32xf32>
    %38 = arith.mulf %30, %37 : vector<8x32xf32>
    %39 = arith.addf %34, %38 : vector<8x32xf32>
    %40 = math.tanh %39 : vector<8x32xf32>
    %cst_24 = arith.constant 1.000000e+00 : f32
    %41 = vector.broadcast %cst_24 : f32 to vector<8x32xf32>
    %42 = arith.subf %41, %31 : vector<8x32xf32>
    %43 = arith.mulf %42, %40 : vector<8x32xf32>
    %44 = arith.mulf %31, %17 : vector<8x32xf32>
    %45 = arith.addf %43, %44 : vector<8x32xf32>
    %c1_i32 = arith.constant 1 : i32
    %46 = arith.truncf %45 : vector<8x32xf32> to vector<8x32xbf16>
    %cst_25 = arith.constant dense<0.000000e+00> : vector<8x96xf32>
    %47 = tpu.matmul %46, %16, %cst_25 {dimension_numbers = #tpu.dot_dimension_numbers<[1], [0], [0], [1], [0, 0, 1, 1], [], []>} : vector<8x32xbf16>, vector<32x96xbf16>, vector<8x96xf32> -> vector<8x96xf32>
    %48 = arith.index_cast %c1_i32 : i32 to index
    %c0_26 = arith.constant 0 : index
    %c0_27 = arith.constant 0 : index
    %49 = vector.load %arg9[%48, %c0_26, %c0_27] : memref<8x8x64xf32, #tpu.memory_space<vmem>>, vector<1x8x64xf32>
    %50 = vector.shape_cast %49 : vector<1x8x64xf32> to vector<8x64xf32>
    %51 = vector.extract_strided_slice %47 {offsets = [0, 0], sizes = [8, 64], strides = [1, 1]} : vector<8x96xf32> to vector<8x64xf32>
    %52 = arith.addf %50, %51 : vector<8x64xf32>
    %53 = arith.negf %52 : vector<8x64xf32>
    %54 = math.exp %53 : vector<8x64xf32>
    %cst_28 = arith.constant 1.000000e+00 : f32
    %55 = vector.broadcast %cst_28 : f32 to vector<8x64xf32>
    %56 = arith.addf %55, %54 : vector<8x64xf32>
    %57 = arith.divf %55, %56 : vector<8x64xf32>
    %58 = vector.extract_strided_slice %57 {offsets = [0, 0], sizes = [8, 32], strides = [1, 1]} : vector<8x64xf32> to vector<8x32xf32>
    %59 = vector.extract_strided_slice %57 {offsets = [0, 32], sizes = [8, 32], strides = [1, 1]} : vector<8x64xf32> to vector<8x32xf32>
    %60 = arith.index_cast %c1_i32 : i32 to index
    %c0_29 = arith.constant 0 : index
    %c0_30 = arith.constant 0 : index
    %61 = vector.load %arg10[%60, %c0_29, %c0_30] : memref<8x8x32xf32, #tpu.memory_space<vmem>>, vector<1x8x32xf32>
    %62 = vector.shape_cast %61 : vector<1x8x32xf32> to vector<8x32xf32>
    %63 = vector.extract_strided_slice %47 {offsets = [0, 64], sizes = [8, 32], strides = [1, 1]} : vector<8x96xf32> to vector<8x32xf32>
    %64 = vector.broadcast %1 : vector<1x32xf32> to vector<8x32xf32>
    %65 = arith.addf %63, %64 : vector<8x32xf32>
    %66 = arith.mulf %58, %65 : vector<8x32xf32>
    %67 = arith.addf %62, %66 : vector<8x32xf32>
    %68 = math.tanh %67 : vector<8x32xf32>
    %cst_31 = arith.constant 1.000000e+00 : f32
    %69 = vector.broadcast %cst_31 : f32 to vector<8x32xf32>
    %70 = arith.subf %69, %59 : vector<8x32xf32>
    %71 = arith.mulf %70, %68 : vector<8x32xf32>
    %72 = arith.mulf %59, %45 : vector<8x32xf32>
    %73 = arith.addf %71, %72 : vector<8x32xf32>
    %c2_i32 = arith.constant 2 : i32
    %74 = arith.truncf %73 : vector<8x32xf32> to vector<8x32xbf16>
    %cst_32 = arith.constant dense<0.000000e+00> : vector<8x96xf32>
    %75 = tpu.matmul %74, %16, %cst_32 {dimension_numbers = #tpu.dot_dimension_numbers<[1], [0], [0], [1], [0, 0, 1, 1], [], []>} : vector<8x32xbf16>, vector<32x96xbf16>, vector<8x96xf32> -> vector<8x96xf32>
    %76 = arith.index_cast %c2_i32 : i32 to index
    %c0_33 = arith.constant 0 : index
    %c0_34 = arith.constant 0 : index
    %77 = vector.load %arg9[%76, %c0_33, %c0_34] : memref<8x8x64xf32, #tpu.memory_space<vmem>>, vector<1x8x64xf32>
    %78 = vector.shape_cast %77 : vector<1x8x64xf32> to vector<8x64xf32>
    %79 = vector.extract_strided_slice %75 {offsets = [0, 0], sizes = [8, 64], strides = [1, 1]} : vector<8x96xf32> to vector<8x64xf32>
    %80 = arith.addf %78, %79 : vector<8x64xf32>
    %81 = arith.negf %80 : vector<8x64xf32>
    %82 = math.exp %81 : vector<8x64xf32>
    %cst_35 = arith.constant 1.000000e+00 : f32
    %83 = vector.broadcast %cst_35 : f32 to vector<8x64xf32>
    %84 = arith.addf %83, %82 : vector<8x64xf32>
    %85 = arith.divf %83, %84 : vector<8x64xf32>
    %86 = vector.extract_strided_slice %85 {offsets = [0, 0], sizes = [8, 32], strides = [1, 1]} : vector<8x64xf32> to vector<8x32xf32>
    %87 = vector.extract_strided_slice %85 {offsets = [0, 32], sizes = [8, 32], strides = [1, 1]} : vector<8x64xf32> to vector<8x32xf32>
    %88 = arith.index_cast %c2_i32 : i32 to index
    %c0_36 = arith.constant 0 : index
    %c0_37 = arith.constant 0 : index
    %89 = vector.load %arg10[%88, %c0_36, %c0_37] : memref<8x8x32xf32, #tpu.memory_space<vmem>>, vector<1x8x32xf32>
    %90 = vector.shape_cast %89 : vector<1x8x32xf32> to vector<8x32xf32>
    %91 = vector.extract_strided_slice %75 {offsets = [0, 64], sizes = [8, 32], strides = [1, 1]} : vector<8x96xf32> to vector<8x32xf32>
    %92 = vector.broadcast %1 : vector<1x32xf32> to vector<8x32xf32>
    %93 = arith.addf %91, %92 : vector<8x32xf32>
    %94 = arith.mulf %86, %93 : vector<8x32xf32>
    %95 = arith.addf %90, %94 : vector<8x32xf32>
    %96 = math.tanh %95 : vector<8x32xf32>
    %cst_38 = arith.constant 1.000000e+00 : f32
    %97 = vector.broadcast %cst_38 : f32 to vector<8x32xf32>
    %98 = arith.subf %97, %87 : vector<8x32xf32>
    %99 = arith.mulf %98, %96 : vector<8x32xf32>
    %100 = arith.mulf %87, %73 : vector<8x32xf32>
    %101 = arith.addf %99, %100 : vector<8x32xf32>
    %c3_i32 = arith.constant 3 : i32
    %102 = arith.truncf %101 : vector<8x32xf32> to vector<8x32xbf16>
    %cst_39 = arith.constant dense<0.000000e+00> : vector<8x96xf32>
    %103 = tpu.matmul %102, %16, %cst_39 {dimension_numbers = #tpu.dot_dimension_numbers<[1], [0], [0], [1], [0, 0, 1, 1], [], []>} : vector<8x32xbf16>, vector<32x96xbf16>, vector<8x96xf32> -> vector<8x96xf32>
    %104 = arith.index_cast %c3_i32 : i32 to index
    %c0_40 = arith.constant 0 : index
    %c0_41 = arith.constant 0 : index
    %105 = vector.load %arg9[%104, %c0_40, %c0_41] : memref<8x8x64xf32, #tpu.memory_space<vmem>>, vector<1x8x64xf32>
    %106 = vector.shape_cast %105 : vector<1x8x64xf32> to vector<8x64xf32>
    %107 = vector.extract_strided_slice %103 {offsets = [0, 0], sizes = [8, 64], strides = [1, 1]} : vector<8x96xf32> to vector<8x64xf32>
    %108 = arith.addf %106, %107 : vector<8x64xf32>
    %109 = arith.negf %108 : vector<8x64xf32>
    %110 = math.exp %109 : vector<8x64xf32>
    %cst_42 = arith.constant 1.000000e+00 : f32
    %111 = vector.broadcast %cst_42 : f32 to vector<8x64xf32>
    %112 = arith.addf %111, %110 : vector<8x64xf32>
    %113 = arith.divf %111, %112 : vector<8x64xf32>
    %114 = vector.extract_strided_slice %113 {offsets = [0, 0], sizes = [8, 32], strides = [1, 1]} : vector<8x64xf32> to vector<8x32xf32>
    %115 = vector.extract_strided_slice %113 {offsets = [0, 32], sizes = [8, 32], strides = [1, 1]} : vector<8x64xf32> to vector<8x32xf32>
    %116 = arith.index_cast %c3_i32 : i32 to index
    %c0_43 = arith.constant 0 : index
    %c0_44 = arith.constant 0 : index
    %117 = vector.load %arg10[%116, %c0_43, %c0_44] : memref<8x8x32xf32, #tpu.memory_space<vmem>>, vector<1x8x32xf32>
    %118 = vector.shape_cast %117 : vector<1x8x32xf32> to vector<8x32xf32>
    %119 = vector.extract_strided_slice %103 {offsets = [0, 64], sizes = [8, 32], strides = [1, 1]} : vector<8x96xf32> to vector<8x32xf32>
    %120 = vector.broadcast %1 : vector<1x32xf32> to vector<8x32xf32>
    %121 = arith.addf %119, %120 : vector<8x32xf32>
    %122 = arith.mulf %114, %121 : vector<8x32xf32>
    %123 = arith.addf %118, %122 : vector<8x32xf32>
    %124 = math.tanh %123 : vector<8x32xf32>
    %cst_45 = arith.constant 1.000000e+00 : f32
    %125 = vector.broadcast %cst_45 : f32 to vector<8x32xf32>
    %126 = arith.subf %125, %115 : vector<8x32xf32>
    %127 = arith.mulf %126, %124 : vector<8x32xf32>
    %128 = arith.mulf %115, %101 : vector<8x32xf32>
    %129 = arith.addf %127, %128 : vector<8x32xf32>
    %c4_i32 = arith.constant 4 : i32
    %130 = arith.truncf %129 : vector<8x32xf32> to vector<8x32xbf16>
    %cst_46 = arith.constant dense<0.000000e+00> : vector<8x96xf32>
    %131 = tpu.matmul %130, %16, %cst_46 {dimension_numbers = #tpu.dot_dimension_numbers<[1], [0], [0], [1], [0, 0, 1, 1], [], []>} : vector<8x32xbf16>, vector<32x96xbf16>, vector<8x96xf32> -> vector<8x96xf32>
    %132 = arith.index_cast %c4_i32 : i32 to index
    %c0_47 = arith.constant 0 : index
    %c0_48 = arith.constant 0 : index
    %133 = vector.load %arg9[%132, %c0_47, %c0_48] : memref<8x8x64xf32, #tpu.memory_space<vmem>>, vector<1x8x64xf32>
    %134 = vector.shape_cast %133 : vector<1x8x64xf32> to vector<8x64xf32>
    %135 = vector.extract_strided_slice %131 {offsets = [0, 0], sizes = [8, 64], strides = [1, 1]} : vector<8x96xf32> to vector<8x64xf32>
    %136 = arith.addf %134, %135 : vector<8x64xf32>
    %137 = arith.negf %136 : vector<8x64xf32>
    %138 = math.exp %137 : vector<8x64xf32>
    %cst_49 = arith.constant 1.000000e+00 : f32
    %139 = vector.broadcast %cst_49 : f32 to vector<8x64xf32>
    %140 = arith.addf %139, %138 : vector<8x64xf32>
    %141 = arith.divf %139, %140 : vector<8x64xf32>
    %142 = vector.extract_strided_slice %141 {offsets = [0, 0], sizes = [8, 32], strides = [1, 1]} : vector<8x64xf32> to vector<8x32xf32>
    %143 = vector.extract_strided_slice %141 {offsets = [0, 32], sizes = [8, 32], strides = [1, 1]} : vector<8x64xf32> to vector<8x32xf32>
    %144 = arith.index_cast %c4_i32 : i32 to index
    %c0_50 = arith.constant 0 : index
    %c0_51 = arith.constant 0 : index
    %145 = vector.load %arg10[%144, %c0_50, %c0_51] : memref<8x8x32xf32, #tpu.memory_space<vmem>>, vector<1x8x32xf32>
    %146 = vector.shape_cast %145 : vector<1x8x32xf32> to vector<8x32xf32>
    %147 = vector.extract_strided_slice %131 {offsets = [0, 64], sizes = [8, 32], strides = [1, 1]} : vector<8x96xf32> to vector<8x32xf32>
    %148 = vector.broadcast %1 : vector<1x32xf32> to vector<8x32xf32>
    %149 = arith.addf %147, %148 : vector<8x32xf32>
    %150 = arith.mulf %142, %149 : vector<8x32xf32>
    %151 = arith.addf %146, %150 : vector<8x32xf32>
    %152 = math.tanh %151 : vector<8x32xf32>
    %cst_52 = arith.constant 1.000000e+00 : f32
    %153 = vector.broadcast %cst_52 : f32 to vector<8x32xf32>
    %154 = arith.subf %153, %143 : vector<8x32xf32>
    %155 = arith.mulf %154, %152 : vector<8x32xf32>
    %156 = arith.mulf %143, %129 : vector<8x32xf32>
    %157 = arith.addf %155, %156 : vector<8x32xf32>
    %c5_i32 = arith.constant 5 : i32
    %158 = arith.truncf %157 : vector<8x32xf32> to vector<8x32xbf16>
    %cst_53 = arith.constant dense<0.000000e+00> : vector<8x96xf32>
    %159 = tpu.matmul %158, %16, %cst_53 {dimension_numbers = #tpu.dot_dimension_numbers<[1], [0], [0], [1], [0, 0, 1, 1], [], []>} : vector<8x32xbf16>, vector<32x96xbf16>, vector<8x96xf32> -> vector<8x96xf32>
    %160 = arith.index_cast %c5_i32 : i32 to index
    %c0_54 = arith.constant 0 : index
    %c0_55 = arith.constant 0 : index
    %161 = vector.load %arg9[%160, %c0_54, %c0_55] : memref<8x8x64xf32, #tpu.memory_space<vmem>>, vector<1x8x64xf32>
    %162 = vector.shape_cast %161 : vector<1x8x64xf32> to vector<8x64xf32>
    %163 = vector.extract_strided_slice %159 {offsets = [0, 0], sizes = [8, 64], strides = [1, 1]} : vector<8x96xf32> to vector<8x64xf32>
    %164 = arith.addf %162, %163 : vector<8x64xf32>
    %165 = arith.negf %164 : vector<8x64xf32>
    %166 = math.exp %165 : vector<8x64xf32>
    %cst_56 = arith.constant 1.000000e+00 : f32
    %167 = vector.broadcast %cst_56 : f32 to vector<8x64xf32>
    %168 = arith.addf %167, %166 : vector<8x64xf32>
    %169 = arith.divf %167, %168 : vector<8x64xf32>
    %170 = vector.extract_strided_slice %169 {offsets = [0, 0], sizes = [8, 32], strides = [1, 1]} : vector<8x64xf32> to vector<8x32xf32>
    %171 = vector.extract_strided_slice %169 {offsets = [0, 32], sizes = [8, 32], strides = [1, 1]} : vector<8x64xf32> to vector<8x32xf32>
    %172 = arith.index_cast %c5_i32 : i32 to index
    %c0_57 = arith.constant 0 : index
    %c0_58 = arith.constant 0 : index
    %173 = vector.load %arg10[%172, %c0_57, %c0_58] : memref<8x8x32xf32, #tpu.memory_space<vmem>>, vector<1x8x32xf32>
    %174 = vector.shape_cast %173 : vector<1x8x32xf32> to vector<8x32xf32>
    %175 = vector.extract_strided_slice %159 {offsets = [0, 64], sizes = [8, 32], strides = [1, 1]} : vector<8x96xf32> to vector<8x32xf32>
    %176 = vector.broadcast %1 : vector<1x32xf32> to vector<8x32xf32>
    %177 = arith.addf %175, %176 : vector<8x32xf32>
    %178 = arith.mulf %170, %177 : vector<8x32xf32>
    %179 = arith.addf %174, %178 : vector<8x32xf32>
    %180 = math.tanh %179 : vector<8x32xf32>
    %cst_59 = arith.constant 1.000000e+00 : f32
    %181 = vector.broadcast %cst_59 : f32 to vector<8x32xf32>
    %182 = arith.subf %181, %171 : vector<8x32xf32>
    %183 = arith.mulf %182, %180 : vector<8x32xf32>
    %184 = arith.mulf %171, %157 : vector<8x32xf32>
    %185 = arith.addf %183, %184 : vector<8x32xf32>
    %c6_i32 = arith.constant 6 : i32
    %186 = arith.truncf %185 : vector<8x32xf32> to vector<8x32xbf16>
    %cst_60 = arith.constant dense<0.000000e+00> : vector<8x96xf32>
    %187 = tpu.matmul %186, %16, %cst_60 {dimension_numbers = #tpu.dot_dimension_numbers<[1], [0], [0], [1], [0, 0, 1, 1], [], []>} : vector<8x32xbf16>, vector<32x96xbf16>, vector<8x96xf32> -> vector<8x96xf32>
    %188 = arith.index_cast %c6_i32 : i32 to index
    %c0_61 = arith.constant 0 : index
    %c0_62 = arith.constant 0 : index
    %189 = vector.load %arg9[%188, %c0_61, %c0_62] : memref<8x8x64xf32, #tpu.memory_space<vmem>>, vector<1x8x64xf32>
    %190 = vector.shape_cast %189 : vector<1x8x64xf32> to vector<8x64xf32>
    %191 = vector.extract_strided_slice %187 {offsets = [0, 0], sizes = [8, 64], strides = [1, 1]} : vector<8x96xf32> to vector<8x64xf32>
    %192 = arith.addf %190, %191 : vector<8x64xf32>
    %193 = arith.negf %192 : vector<8x64xf32>
    %194 = math.exp %193 : vector<8x64xf32>
    %cst_63 = arith.constant 1.000000e+00 : f32
    %195 = vector.broadcast %cst_63 : f32 to vector<8x64xf32>
    %196 = arith.addf %195, %194 : vector<8x64xf32>
    %197 = arith.divf %195, %196 : vector<8x64xf32>
    %198 = vector.extract_strided_slice %197 {offsets = [0, 0], sizes = [8, 32], strides = [1, 1]} : vector<8x64xf32> to vector<8x32xf32>
    %199 = vector.extract_strided_slice %197 {offsets = [0, 32], sizes = [8, 32], strides = [1, 1]} : vector<8x64xf32> to vector<8x32xf32>
    %200 = arith.index_cast %c6_i32 : i32 to index
    %c0_64 = arith.constant 0 : index
    %c0_65 = arith.constant 0 : index
    %201 = vector.load %arg10[%200, %c0_64, %c0_65] : memref<8x8x32xf32, #tpu.memory_space<vmem>>, vector<1x8x32xf32>
    %202 = vector.shape_cast %201 : vector<1x8x32xf32> to vector<8x32xf32>
    %203 = vector.extract_strided_slice %187 {offsets = [0, 64], sizes = [8, 32], strides = [1, 1]} : vector<8x96xf32> to vector<8x32xf32>
    %204 = vector.broadcast %1 : vector<1x32xf32> to vector<8x32xf32>
    %205 = arith.addf %203, %204 : vector<8x32xf32>
    %206 = arith.mulf %198, %205 : vector<8x32xf32>
    %207 = arith.addf %202, %206 : vector<8x32xf32>
    %208 = math.tanh %207 : vector<8x32xf32>
    %cst_66 = arith.constant 1.000000e+00 : f32
    %209 = vector.broadcast %cst_66 : f32 to vector<8x32xf32>
    %210 = arith.subf %209, %199 : vector<8x32xf32>
    %211 = arith.mulf %210, %208 : vector<8x32xf32>
    %212 = arith.mulf %199, %185 : vector<8x32xf32>
    %213 = arith.addf %211, %212 : vector<8x32xf32>
    %c7_i32 = arith.constant 7 : i32
    %214 = arith.truncf %213 : vector<8x32xf32> to vector<8x32xbf16>
    %cst_67 = arith.constant dense<0.000000e+00> : vector<8x96xf32>
    %215 = tpu.matmul %214, %16, %cst_67 {dimension_numbers = #tpu.dot_dimension_numbers<[1], [0], [0], [1], [0, 0, 1, 1], [], []>} : vector<8x32xbf16>, vector<32x96xbf16>, vector<8x96xf32> -> vector<8x96xf32>
    %216 = arith.index_cast %c7_i32 : i32 to index
    %c0_68 = arith.constant 0 : index
    %c0_69 = arith.constant 0 : index
    %217 = vector.load %arg9[%216, %c0_68, %c0_69] : memref<8x8x64xf32, #tpu.memory_space<vmem>>, vector<1x8x64xf32>
    %218 = vector.shape_cast %217 : vector<1x8x64xf32> to vector<8x64xf32>
    %219 = vector.extract_strided_slice %215 {offsets = [0, 0], sizes = [8, 64], strides = [1, 1]} : vector<8x96xf32> to vector<8x64xf32>
    %220 = arith.addf %218, %219 : vector<8x64xf32>
    %221 = arith.negf %220 : vector<8x64xf32>
    %222 = math.exp %221 : vector<8x64xf32>
    %cst_70 = arith.constant 1.000000e+00 : f32
    %223 = vector.broadcast %cst_70 : f32 to vector<8x64xf32>
    %224 = arith.addf %223, %222 : vector<8x64xf32>
    %225 = arith.divf %223, %224 : vector<8x64xf32>
    %226 = vector.extract_strided_slice %225 {offsets = [0, 0], sizes = [8, 32], strides = [1, 1]} : vector<8x64xf32> to vector<8x32xf32>
    %227 = vector.extract_strided_slice %225 {offsets = [0, 32], sizes = [8, 32], strides = [1, 1]} : vector<8x64xf32> to vector<8x32xf32>
    %228 = arith.index_cast %c7_i32 : i32 to index
    %c0_71 = arith.constant 0 : index
    %c0_72 = arith.constant 0 : index
    %229 = vector.load %arg10[%228, %c0_71, %c0_72] : memref<8x8x32xf32, #tpu.memory_space<vmem>>, vector<1x8x32xf32>
    %230 = vector.shape_cast %229 : vector<1x8x32xf32> to vector<8x32xf32>
    %231 = vector.extract_strided_slice %215 {offsets = [0, 64], sizes = [8, 32], strides = [1, 1]} : vector<8x96xf32> to vector<8x32xf32>
    %232 = vector.broadcast %1 : vector<1x32xf32> to vector<8x32xf32>
    %233 = arith.addf %231, %232 : vector<8x32xf32>
    %234 = arith.mulf %226, %233 : vector<8x32xf32>
    %235 = arith.addf %230, %234 : vector<8x32xf32>
    %236 = math.tanh %235 : vector<8x32xf32>
    %cst_73 = arith.constant 1.000000e+00 : f32
    %237 = vector.broadcast %cst_73 : f32 to vector<8x32xf32>
    %238 = arith.subf %237, %227 : vector<8x32xf32>
    %239 = arith.mulf %238, %236 : vector<8x32xf32>
    %240 = arith.mulf %227, %213 : vector<8x32xf32>
    %241 = arith.addf %239, %240 : vector<8x32xf32>
    %c8_i32 = arith.constant 8 : i32
    %c0_74 = arith.constant 0 : index
    %c0_75 = arith.constant 0 : index
    %242 = vector.load %arg8[%c0_74, %c0_75] : memref<8x32xf32, #tpu.memory_space<vmem>>, vector<8x32xf32>
    tpu.vector_store %arg8[%c0_74, %c0_75], %241 {strides = array<i32>} : memref<8x32xf32, #tpu.memory_space<vmem>>, vector<8x32xf32>,
    %c0_76 = arith.constant 0 : index
    %c0_77 = arith.constant 0 : index
    %243 = vector.load %arg6[%c0_76, %c0_77] : memref<32x16xf32, #tpu.memory_space<vmem>>, vector<32x16xf32>
    %cst_78 = arith.constant dense<0.000000e+00> : vector<8x16xf32>
    %244 = tpu.matmul %241, %243, %cst_78 {dimension_numbers = #tpu.dot_dimension_numbers<[1], [0], [0], [1], [0, 0, 1, 1], [], []>} : vector<8x32xf32>, vector<32x16xf32>, vector<8x16xf32> -> vector<8x16xf32>
    %245 = vector.broadcast %2 : vector<1x16xf32> to vector<8x16xf32>
    %246 = arith.addf %244, %245 : vector<8x16xf32>
    %cst_79 = arith.constant dense<0xFF800000> : vector<8xf32>
    %247 = vector.multi_reduction <maximumf>, %246, %cst_79 [1] : vector<8x16xf32> to vector<8xf32>
    %248 = vector.shape_cast %247 : vector<8xf32> to vector<8x1xf32>
    %249 = vector.broadcast %248 : vector<8x1xf32> to vector<8x16xf32>
    %250 = arith.subf %246, %249 : vector<8x16xf32>
    %251 = math.exp %250 : vector<8x16xf32>
    %cst_80 = arith.constant dense<0.000000e+00> : vector<8xf32>
    %252 = vector.multi_reduction <add>, %251, %cst_80 [1] : vector<8x16xf32> to vector<8xf32>
    %253 = vector.shape_cast %252 : vector<8xf32> to vector<8x1xf32>
    %254 = math.log %253 : vector<8x1xf32>
    %255 = vector.broadcast %254 : vector<8x1xf32> to vector<8x16xf32>
    %256 = arith.subf %250, %255 : vector<8x16xf32>
    %c0_81 = arith.constant 0 : index
    %c0_82 = arith.constant 0 : index
    %257 = vector.load %arg7[%c0_81, %c0_82] : memref<8x16xf32, #tpu.memory_space<vmem>>, vector<8x16xf32>
    tpu.vector_store %arg7[%c0_81, %c0_82], %256 {strides = array<i32>} : memref<8x16xf32, #tpu.memory_space<vmem>>, vector<8x16xf32>,
    return
  }
  func.func @transform_0(%arg0: i32) -> (i32, i32, i32) {
    %c0_i32 = arith.constant 0 : i32
    %c0_i32_0 = arith.constant 0 : i32
    %c0_i32_1 = arith.constant 0 : i32
    return %c0_i32, %arg0, %c0_i32_0 : i32, i32, i32
  }
  func.func @transform_1(%arg0: i32) -> (i32, i32) {
    %c0_i32 = arith.constant 0 : i32
    %c0_i32_0 = arith.constant 0 : i32
    return %arg0, %c0_i32 : i32, i32
  }
  func.func @transform_2(%arg0: i32) -> (i32, i32) {
    %c0_i32 = arith.constant 0 : i32
    %c0_i32_0 = arith.constant 0 : i32
    %c0_i32_1 = arith.constant 0 : i32
    return %c0_i32, %c0_i32_0 : i32, i32
  }
  func.func @transform_3(%arg0: i32) -> (i32, i32) {
    %c0_i32 = arith.constant 0 : i32
    %c0_i32_0 = arith.constant 0 : i32
    %c0_i32_1 = arith.constant 0 : i32
    return %c0_i32, %c0_i32_0 : i32, i32
  }
  func.func @transform_4(%arg0: i32) -> (i32, i32) {
    %c0_i32 = arith.constant 0 : i32
    %c0_i32_0 = arith.constant 0 : i32
    %c0_i32_1 = arith.constant 0 : i32
    return %c0_i32, %c0_i32_0 : i32, i32
  }
  func.func @transform_5(%arg0: i32) -> (i32, i32) {
    %c0_i32 = arith.constant 0 : i32
    %c0_i32_0 = arith.constant 0 : i32
    %c0_i32_1 = arith.constant 0 : i32
    return %c0_i32, %c0_i32_0 : i32, i32
  }
  func.func @transform_6(%arg0: i32) -> (i32, i32) {
    %c0_i32 = arith.constant 0 : i32
    %c0_i32_0 = arith.constant 0 : i32
    return %arg0, %c0_i32 : i32, i32
  }
  func.func @transform_7(%arg0: i32) -> (i32, i32) {
    %c0_i32 = arith.constant 0 : i32
    %c0_i32_0 = arith.constant 0 : i32
    return %arg0, %c0_i32 : i32, i32
  }
}

</mosaic_0001>

<llo_original>
// kernel: tpu_custom_call.1
$region0: #{tpu_custom_call.1}
  #allocation0 [shape = 'u32[]', space=smem, size = 0x4, offset = 0x4, fixed_abs, tag = 'smem constant byte address 0x4 - core index']
  #allocation1 [shape = 'u32[72,128]{1,0:T(1,128)}', space=vmem, size = 0x9000, scoped, tag = 'internal scratch']
  #allocation2 [shape = 'f32[8,8,64]{2,1,0:T(8,128)}', space=vmem, size = 0x8000, scoped, tag = 'scratch operand']
  #allocation3 [shape = 'f32[8,8,32]{2,1,0:T(8,128)}', space=vmem, size = 0x8000, scoped, tag = 'scratch operand']
  %s0 = inlined_call_operand.hbm [shape: f32[8,8,32], index: 0, kind: input, shape index: {}]
  %s1 = inlined_call_operand.vmem [shape: f32[8,32], index: 1, kind: input, shape index: {}]
  %s2 = inlined_call_operand.vmem [shape: bf16[32,96], index: 2, kind: input, shape index: {}]
  %s3 = inlined_call_operand.vmem [shape: bf16[32,96], index: 3, kind: input, shape index: {}]
  %s4 = inlined_call_operand.vmem [shape: f32[3,96], index: 4, kind: input, shape index: {}]
  %s5 = inlined_call_operand.vmem [shape: f32[32,16], index: 5, kind: input, shape index: {}]
  %s6 = inlined_call_operand.hbm [shape: f32[8,16], index: 6, kind: output, shape index: {0}]
  %s7 = inlined_call_operand.hbm [shape: f32[8,32], index: 7, kind: output, shape index: {1}]
  %8 = xla_tuple %s6, %s7
  %s9 = sld [smem:[#allocation0]]
  $region46: #{tpu_custom_call.1} parent=0
    _
  %s11 = ssub.s32 1, %s9
  %s12 = scalar_select 0, %s11, %s9
  $region1: #{tpu_custom_call.1} parent=0
    #allocation4 [shape = 'u8[32768]{0}', space=vmem, size = 0x8000, scoped, tag = 'input window, operand 0, single buffered']
    #allocation5 [shape = 's32[1]{0}', space=sflag, size = 0x4, scoped, tag = 'scoped memory for tpu_custom_call.1']
    #allocation6 [shape = 's32[1]{0}', space=sflag, size = 0x4, scoped, tag = 'scoped memory for tpu_custom_call.1']
    #allocation7 [shape = 'u8[4096]{0}', space=vmem, size = 0x1000, scoped, tag = 'output window, operand 0, single buffered']
    #allocation8 [shape = 'u8[4096]{0}', space=vmem, size = 0x1000, scoped, tag = 'output window, operand 1, single buffered']
    #allocation9 [shape = 's32[1]{0}', space=sflag, size = 0x4, scoped, tag = 'scoped memory for tpu_custom_call.1']
    %13 = vsyncpa [#allocation5], 0
    %14 = vsyncpa [#allocation6], 0
    %15 = vsyncpa [#allocation9], 0
    // Predicated region
    $region2: #{tpu_custom_call.1} parent=1 // pred_check
      _
    $region3: #{tpu_custom_call.1} parent=1 // pred_check_branch
      %17 = sbr.rel (0) target = $region5
    $region4: #{tpu_custom_call.1} parent=1 // pred_region
      %19 = vsyncadd [#allocation5], 0
      %s20 = sshll.u32 %s0, 4
      %s21 = int_to_ptr.hbm [resolvable:$true] %s20
      %s22 = sshll.u32 [#allocation4], 4
      %s23 = int_to_ptr.vmem [resolvable:$true] %s22
      %28 = dma.hbm_to_vmem [thread:$0]  %s21, 1024, %s23, [#allocation5], 128, 128, 8
    $region5: #{tpu_custom_call.1} parent=1 // pred_fallthru
      _
    // Predicated region
    $region6: #{tpu_custom_call.1} parent=1 // pred_check
      _
    $region7: #{tpu_custom_call.1} parent=1 // pred_check_branch
      %30 = sbr.rel (0) target = $region9
    $region8: #{tpu_custom_call.1} parent=1 // pred_region
      _
    $region9: #{tpu_custom_call.1} parent=1 // pred_fallthru
      _
    // Predicated region
    $region10: #{tpu_custom_call.1} parent=1 // pred_check
      _
    $region11: #{tpu_custom_call.1} parent=1 // pred_check_branch
      %32 = sbr.rel (0) target = $region13
    $region12: #{tpu_custom_call.1} parent=1 // pred_region
      _
    $region13: #{tpu_custom_call.1} parent=1 // pred_fallthru
      _
    // Predicated region
    $region14: #{tpu_custom_call.1} parent=1 // pred_check
      _
    $region15: #{tpu_custom_call.1} parent=1 // pred_check_branch
      %34 = sbr.rel (0) target = $region17
    $region16: #{tpu_custom_call.1} parent=1 // pred_region
      _
    $region17: #{tpu_custom_call.1} parent=1 // pred_fallthru
      _
    // Predicated region
    $region18: #{tpu_custom_call.1} parent=1 // pred_check
      _
    $region19: #{tpu_custom_call.1} parent=1 // pred_check_branch
      %36 = sbr.rel (0) target = $region21
    $region20: #{tpu_custom_call.1} parent=1 // pred_region
      _
    $region21: #{tpu_custom_call.1} parent=1 // pred_fallthru
      _
    // Predicated region
    $region22: #{tpu_custom_call.1} parent=1 // pred_check
      _
    $region23: #{tpu_custom_call.1} parent=1 // pred_check_branch
      %38 = sbr.rel (0) target = $region25
    $region24: #{tpu_custom_call.1} parent=1 // pred_region
      _
    $region25: #{tpu_custom_call.1} parent=1 // pred_fallthru
      _
    // Predicated region
    $region26: #{tpu_custom_call.1} parent=1 // pred_check
      _
    $region27: #{tpu_custom_call.1} parent=1 // pred_check_branch
      %40 = sbr.rel (0) target = $region29
    $region28: #{tpu_custom_call.1} parent=1 // pred_region
      %42 = dma.done [#allocation5], 1024
    $region29: #{tpu_custom_call.1} parent=1 // pred_fallthru
      _
    %v44 = vld [vmem:[%s4] sm:$0x1]
    %v45 = vld [vmem:[%s4 + $0x1] sm:$0x1]
    %v46 = vld [vmem:[%s4 + $0x2] sm:$0x1]
    %v47 = vld [vmem:[#allocation4] sm:$0xff]
    %v48 = vld [vmem:[#allocation4 + $0x8] sm:$0xff]
    %v49 = vld [vmem:[#allocation4 + $0x10] sm:$0xff]
    %v50 = vld [vmem:[#allocation4 + $0x18] sm:$0xff]
    %v51 = vld [vmem:[#allocation4 + $0x20] sm:$0xff]
    %v52 = vld [vmem:[#allocation4 + $0x28] sm:$0xff]
    %v53 = vld [vmem:[#allocation4 + $0x30] sm:$0xff]
    %v54 = vld [vmem:[#allocation4 + $0x38] sm:$0xff]
    %v55 = vpack.c.bf16 %v48, %v47
    %v56 = vpack.c.bf16 %v50, %v49
    %v57 = vpack.c.bf16 %v52, %v51
    %v58 = vpack.c.bf16 %v54, %v53
    %v59 = vld [vmem:[%s2] sm:$0xf]
    %v60 = vld [vmem:[%s2 + $0x4] sm:$0xf]
    %v61 = vld [vmem:[%s2 + $0x8] sm:$0xf]
    %v62 = vld [vmem:[%s2 + $0xc] sm:$0xf]
    %v63 = vperm.slane %v44, 0
    %v68 = vunpack.c.l.b16 %v59
    %v69 = vunpack.c.l.b16 %v60
    %v70 = vunpack.c.l.b16 %v61
    %v71 = vunpack.c.l.b16 %v62
    %v72 = vpack.c.b16 %v69, %v68
    %v73 = vpack.c.b16 %v71, %v70
    %vm76 = vcmask 261120
    %v78 = vsel %vm76, %v55, 0
    %v81 = vsel %vm76, %v56, 0
    %v84 = vsel %vm76, %v57, 0
    %v87 = vsel %vm76, %v58, 0
    %89 = vmatpush.bf16.msra.mxu0 0
    %90 = vmatpush.bf16.msra.mxu0 0
    %91 = vmatpush.bf16.msra.mxu0 0
    %92 = vmatpush.bf16.msra.mxu0 0
    %93 = vmatpush.bf16.msra.mxu0 0
    %94 = vmatpush.bf16.msra.mxu0 0
    %95 = vmatpush.bf16.msra.mxu0 %v73
    %96 = vmatpush.bf16.msra.mxu0 %v72
    %97 = vmatmul.bf16.gmra.mxu0 %v78
    %v98 = vpop.f32.mrf.mxu0
    %v99 = vadd.f32 %v63, %v98
    %v100 = vpop.f32.mrf.mxu0
    %v101 = vadd.f32 %v63, %v100
    %102 = vmatmul.bf16.gmra.mxu0 %v81
    %v103 = vpop.f32.mrf.mxu0
    %v104 = vadd.f32 %v63, %v103
    %v105 = vpop.f32.mrf.mxu0
    %v106 = vadd.f32 %v63, %v105
    %107 = vmatmul.bf16.gmra.mxu0 %v84
    %v108 = vpop.f32.mrf.mxu0
    %v109 = vadd.f32 %v63, %v108
    %v110 = vpop.f32.mrf.mxu0
    %v111 = vadd.f32 %v63, %v110
    %112 = vmatmul.bf16.gmra.mxu0 %v87
    %v113 = vpop.f32.mrf.mxu0
    %v114 = vadd.f32 %v63, %v113
    %v115 = vpop.f32.mrf.mxu0
    %v116 = vadd.f32 %v63, %v115
    %117 = vdwg.mxu0
    %vm118 = vcmask 523264
    %119 = vst.msk [vmem:[#allocation2] sm:$0xff] %vm118, %v99
    %120 = vst.msk [vmem:[#allocation2 + $0x8] sm:$0xff] %vm118, %v101
    %121 = vst.msk [vmem:[#allocation2 + $0x10] sm:$0xff] %vm118, %v104
    %122 = vst.msk [vmem:[#allocation2 + $0x18] sm:$0xff] %vm118, %v106
    %123 = vst.msk [vmem:[#allocation2 + $0x20] sm:$0xff] %vm118, %v109
    %124 = vst.msk [vmem:[#allocation2 + $0x28] sm:$0xff] %vm118, %v111
    %125 = vst.msk [vmem:[#allocation2 + $0x30] sm:$0xff] %vm118, %v114
    %126 = vst.msk [vmem:[#allocation2 + $0x38] sm:$0xff] %vm118, %v116
    %135 = vrot.lane.b32.xlu0 %v99, 64
    %v136 = vpop.permute.xlu0 %135
    %137 = vrot.lane.b32.xlu0 %v101, 64
    %v138 = vpop.permute.xlu0 %137
    %139 = vrot.lane.b32.xlu0 %v104, 64
    %v140 = vpop.permute.xlu0 %139
    %141 = vrot.lane.b32.xlu0 %v106, 64
    %v142 = vpop.permute.xlu0 %141
    %143 = vrot.lane.b32.xlu0 %v109, 64
    %v144 = vpop.permute.xlu0 %143
    %145 = vrot.lane.b32.xlu0 %v111, 64
    %v146 = vpop.permute.xlu0 %145
    %147 = vrot.lane.b32.xlu0 %v114, 64
    %v148 = vpop.permute.xlu0 %147
    %149 = vrot.lane.b32.xlu0 %v116, 64
    %v150 = vpop.permute.xlu0 %149
    %159 = vst.msk [vmem:[#allocation3] sm:$0xff] %vm76, %v136
    %160 = vst.msk [vmem:[#allocation3 + $0x8] sm:$0xff] %vm76, %v138
    %161 = vst.msk [vmem:[#allocation3 + $0x10] sm:$0xff] %vm76, %v140
    %162 = vst.msk [vmem:[#allocation3 + $0x18] sm:$0xff] %vm76, %v142
    %163 = vst.msk [vmem:[#allocation3 + $0x20] sm:$0xff] %vm76, %v144
    %164 = vst.msk [vmem:[#allocation3 + $0x28] sm:$0xff] %vm76, %v146
    %165 = vst.msk [vmem:[#allocation3 + $0x30] sm:$0xff] %vm76, %v148
    %166 = vst.msk [vmem:[#allocation3 + $0x38] sm:$0xff] %vm76, %v150
    %v167 = vld [vmem:[%s3] sm:$0xf]
    %v168 = vld [vmem:[%s3 + $0x4] sm:$0xf]
    %v169 = vld [vmem:[%s3 + $0x8] sm:$0xf]
    %v170 = vld [vmem:[%s3 + $0xc] sm:$0xf]
    %v171 = vld [vmem:[%s1] sm:$0xff]
    %v172 = vpack.c.bf16 %v171, %v171
    %v177 = vunpack.c.l.b16 %v167
    %v178 = vunpack.c.l.b16 %v168
    %v179 = vunpack.c.l.b16 %v169
    %v180 = vunpack.c.l.b16 %v170
    %v181 = vpack.c.b16 %v178, %v177
    %v182 = vpack.c.b16 %v180, %v179
    %v186 = vsel %vm76, %v172, 0
    %188 = vmatpush.bf16.msra.mxu0 0
    %189 = vmatpush.bf16.msra.mxu0 0
    %190 = vmatpush.bf16.msra.mxu0 0
    %191 = vmatpush.bf16.msra.mxu0 0
    %192 = vmatpush.bf16.msra.mxu0 0
    %193 = vmatpush.bf16.msra.mxu0 0
    %194 = vmatpush.bf16.msra.mxu0 %v182
    %195 = vmatpush.bf16.msra.mxu0 %v181
    %196 = vmatmul.bf16.gmra.mxu0 %v186
    %v197 = vpop.f32.mrf.mxu0
    %v198 = vadd.f32 0.0, %v197
    %v199 = vpop.f32.mrf.mxu0
    %200 = vdwg.mxu0
    %v201 = vld [vmem:[#allocation2] sm:$0xff]
    %v202 = vadd.f32 %v201, %v198
    %v203 = vxor.u32 %v202, 2147483648
    %v204 = vmul.f32 %v203, 1.442695
    %v205 = vpow.pop %v204
    %v206 = vadd.f32 %v205, 1.0
    %v207 = vrcp.pop %v206
    %v208 = vmul.f32 %v206, %v207
    %v209 = vsub.f32 1.0, %v208
    %v210 = vmul.f32 %v207, %v209
    %v211 = vadd.f32 %v207, %v210
    %vm212 = vweird.f32 %v206
    %vm213 = vweird.f32 %v207
    %vm214 = vmor %vm212, %vm213
    %v215 = vsel %vm214, %v207, %v211
    %v216 = vand.u32 2147483647, %v206
    %vm217 = vcmp.eq.f32.partialorder %v216, 8.507059e+37
    %v218 = vand.u32 %v206, 2147483648
    %v219 = vor.u32 1.1754944e-38, %v218
    %v220 = vsel %vm217, %v219, %v215
    %v221 = vmul.f32 1.0, %v220
    %v222 = vld [vmem:[#allocation3] sm:$0xff]
    %v223 = vperm.slane %v45, 0
    %225 = vrot.lane.b32.xlu0 %v223, 64
    %v226 = vpop.permute.xlu0 %225
    %v228 = vadd.f32 %v198, %v226
    %230 = vrot.lane.b32.xlu0 %v228, 64
    %v231 = vpop.permute.xlu0 %230
    %v233 = vmul.f32 %v221, %v231
    %v234 = vadd.f32 %v222, %v233
    %v235 = vtanh.pop %v234
    %v236 = vsub.f32 1.0, %v221
    %238 = vrot.lane.b32.xlu0 %v235, 32
    %v239 = vpop.permute.xlu0 %238
    %v241 = vmul.f32 %v236, %v239
    %243 = vrot.lane.b32.xlu0 %v171, 32
    %v244 = vpop.permute.xlu0 %243
    %v246 = vmul.f32 %v221, %v244
    %v247 = vadd.f32 %v241, %v246
    %v248 = vpack.c.bf16 %v247, %v247
    %250 = vrot.lane.b32.xlu0 %v248, 96
    %v251 = vpop.permute.xlu0 %250
    %v253 = vsel %vm76, %v251, 0
    %255 = vmatpush.bf16.msra.mxu0 0
    %256 = vmatpush.bf16.msra.mxu0 0
    %257 = vmatpush.bf16.msra.mxu0 0
    %258 = vmatpush.bf16.msra.mxu0 0
    %259 = vmatpush.bf16.msra.mxu0 0
    %260 = vmatpush.bf16.msra.mxu0 0
    %261 = vmatpush.bf16.msra.mxu0 %v182
    %262 = vmatpush.bf16.msra.mxu0 %v181
    %263 = vmatmul.bf16.gmra.mxu0 %v253
    %v264 = vpop.f32.mrf.mxu0
    %v265 = vadd.f32 0.0, %v264
    %v266 = vpop.f32.mrf.mxu0
    %267 = vdwg.mxu0
    %s268 = scalar_lea.vmem [#allocation2], 8
    %v269 = vld [vmem:[%s268] sm:$0xff]
    %v270 = vadd.f32 %v269, %v265
    %v271 = vxor.u32 %v270, 2147483648
    %v272 = vmul.f32 %v271, 1.442695
    %v273 = vpow.pop %v272
    %v274 = vadd.f32 %v273, 1.0
    %v275 = vrcp.pop %v274
    %v276 = vmul.f32 %v274, %v275
    %v277 = vsub.f32 1.0, %v276
    %v278 = vmul.f32 %v275, %v277
    %v279 = vadd.f32 %v275, %v278
    %vm280 = vweird.f32 %v274
    %vm281 = vweird.f32 %v275
    %vm282 = vmor %vm280, %vm281
    %v283 = vsel %vm282, %v275, %v279
    %v284 = vand.u32 2147483647, %v274
    %vm285 = vcmp.eq.f32.partialorder %v284, 8.507059e+37
    %v286 = vand.u32 %v274, 2147483648
    %v287 = vor.u32 1.1754944e-38, %v286
    %v288 = vsel %vm285, %v287, %v283
    %v289 = vmul.f32 1.0, %v288
    %s290 = scalar_lea.vmem [#allocation3], 8
    %v291 = vld [vmem:[%s290] sm:$0xff]
    %v292 = vadd.f32 %v265, %v226
    %294 = vrot.lane.b32.xlu0 %v292, 64
    %v295 = vpop.permute.xlu0 %294
    %v297 = vmul.f32 %v289, %v295
    %v298 = vadd.f32 %v291, %v297
    %v299 = vtanh.pop %v298
    %v300 = vsub.f32 1.0, %v289
    %302 = vrot.lane.b32.xlu0 %v299, 32
    %v303 = vpop.permute.xlu0 %302
    %v305 = vmul.f32 %v300, %v303
    %v306 = vmul.f32 %v289, %v247
    %v307 = vadd.f32 %v305, %v306
    %v308 = vpack.c.bf16 %v307, %v307
    %310 = vrot.lane.b32.xlu0 %v308, 96
    %v311 = vpop.permute.xlu0 %310
    %v313 = vsel %vm76, %v311, 0
    %315 = vmatpush.bf16.msra.mxu0 0
    %316 = vmatpush.bf16.msra.mxu0 0
    %317 = vmatpush.bf16.msra.mxu0 0
    %318 = vmatpush.bf16.msra.mxu0 0
    %319 = vmatpush.bf16.msra.mxu0 0
    %320 = vmatpush.bf16.msra.mxu0 0
    %321 = vmatpush.bf16.msra.mxu0 %v182
    %322 = vmatpush.bf16.msra.mxu0 %v181
    %323 = vmatmul.bf16.gmra.mxu0 %v313
    %v324 = vpop.f32.mrf.mxu0
    %v325 = vadd.f32 0.0, %v324
    %v326 = vpop.f32.mrf.mxu0
    %327 = vdwg.mxu0
    %s328 = scalar_lea.vmem [#allocation2], 16
    %v329 = vld [vmem:[%s328] sm:$0xff]
    %v330 = vadd.f32 %v329, %v325
    %v331 = vxor.u32 %v330, 2147483648
    %v332 = vmul.f32 %v331, 1.442695
    %v333 = vpow.pop %v332
    %v334 = vadd.f32 %v333, 1.0
    %v335 = vrcp.pop %v334
    %v336 = vmul.f32 %v334, %v335
    %v337 = vsub.f32 1.0, %v336
    %v338 = vmul.f32 %v335, %v337
    %v339 = vadd.f32 %v335, %v338
    %vm340 = vweird.f32 %v334
    %vm341 = vweird.f32 %v335
    %vm342 = vmor %vm340, %vm341
    %v343 = vsel %vm342, %v335, %v339
    %v344 = vand.u32 2147483647, %v334
    %vm345 = vcmp.eq.f32.partialorder %v344, 8.507059e+37
    %v346 = vand.u32 %v334, 2147483648
    %v347 = vor.u32 1.1754944e-38, %v346
    %v348 = vsel %vm345, %v347, %v343
    %v349 = vmul.f32 1.0, %v348
    %s350 = scalar_lea.vmem [#allocation3], 16
    %v351 = vld [vmem:[%s350] sm:$0xff]
    %v352 = vadd.f32 %v325, %v226
    %354 = vrot.lane.b32.xlu0 %v352, 64
    %v355 = vpop.permute.xlu0 %354
    %v357 = vmul.f32 %v349, %v355
    %v358 = vadd.f32 %v351, %v357
    %v359 = vtanh.pop %v358
    %v360 = vsub.f32 1.0, %v349
    %362 = vrot.lane.b32.xlu0 %v359, 32
    %v363 = vpop.permute.xlu0 %362
    %v365 = vmul.f32 %v360, %v363
    %v366 = vmul.f32 %v349, %v307
    %v367 = vadd.f32 %v365, %v366
    %v368 = vpack.c.bf16 %v367, %v367
    %370 = vrot.lane.b32.xlu0 %v368, 96
    %v371 = vpop.permute.xlu0 %370
    %v373 = vsel %vm76, %v371, 0
    %375 = vmatpush.bf16.msra.mxu0 0
    %376 = vmatpush.bf16.msra.mxu0 0
    %377 = vmatpush.bf16.msra.mxu0 0
    %378 = vmatpush.bf16.msra.mxu0 0
    %379 = vmatpush.bf16.msra.mxu0 0
    %380 = vmatpush.bf16.msra.mxu0 0
    %381 = vmatpush.bf16.msra.mxu0 %v182
    %382 = vmatpush.bf16.msra.mxu0 %v181
    %383 = vmatmul.bf16.gmra.mxu0 %v373
    %v384 = vpop.f32.mrf.mxu0
    %v385 = vadd.f32 0.0, %v384
    %v386 = vpop.f32.mrf.mxu0
    %387 = vdwg.mxu0
    %s388 = scalar_lea.vmem [#allocation2], 24
    %v389 = vld [vmem:[%s388] sm:$0xff]
    %v390 = vadd.f32 %v389, %v385
    %v391 = vxor.u32 %v390, 2147483648
    %v392 = vmul.f32 %v391, 1.442695
    %v393 = vpow.pop %v392
    %v394 = vadd.f32 %v393, 1.0
    %v395 = vrcp.pop %v394
    %v396 = vmul.f32 %v394, %v395
    %v397 = vsub.f32 1.0, %v396
    %v398 = vmul.f32 %v395, %v397
    %v399 = vadd.f32 %v395, %v398
    %vm400 = vweird.f32 %v394
    %vm401 = vweird.f32 %v395
    %vm402 = vmor %vm400, %vm401
    %v403 = vsel %vm402, %v395, %v399
    %v404 = vand.u32 2147483647, %v394
    %vm405 = vcmp.eq.f32.partialorder %v404, 8.507059e+37
    %v406 = vand.u32 %v394, 2147483648
    %v407 = vor.u32 1.1754944e-38, %v406
    %v408 = vsel %vm405, %v407, %v403
    %v409 = vmul.f32 1.0, %v408
    %s410 = scalar_lea.vmem [#allocation3], 24
    %v411 = vld [vmem:[%s410] sm:$0xff]
    %v412 = vadd.f32 %v385, %v226
    %414 = vrot.lane.b32.xlu0 %v412, 64
    %v415 = vpop.permute.xlu0 %414
    %v417 = vmul.f32 %v409, %v415
    %v418 = vadd.f32 %v411, %v417
    %v419 = vtanh.pop %v418
    %v420 = vsub.f32 1.0, %v409
    %422 = vrot.lane.b32.xlu0 %v419, 32
    %v423 = vpop.permute.xlu0 %422
    %v425 = vmul.f32 %v420, %v423
    %v426 = vmul.f32 %v409, %v367
    %v427 = vadd.f32 %v425, %v426
    %v428 = vpack.c.bf16 %v427, %v427
    %430 = vrot.lane.b32.xlu0 %v428, 96
    %v431 = vpop.permute.xlu0 %430
    %v433 = vsel %vm76, %v431, 0
    %435 = vmatpush.bf16.msra.mxu0 0
    %436 = vmatpush.bf16.msra.mxu0 0
    %437 = vmatpush.bf16.msra.mxu0 0
    %438 = vmatpush.bf16.msra.mxu0 0
    %439 = vmatpush.bf16.msra.mxu0 0
    %440 = vmatpush.bf16.msra.mxu0 0
    %441 = vmatpush.bf16.msra.mxu0 %v182
    %442 = vmatpush.bf16.msra.mxu0 %v181
    %443 = vmatmul.bf16.gmra.mxu0 %v433
    %v444 = vpop.f32.mrf.mxu0
    %v445 = vadd.f32 0.0, %v444
    %v446 = vpop.f32.mrf.mxu0
    %447 = vdwg.mxu0
    %s448 = scalar_lea.vmem [#allocation2], 32
    %v449 = vld [vmem:[%s448] sm:$0xff]
    %v450 = vadd.f32 %v449, %v445
    %v451 = vxor.u32 %v450, 2147483648
    %v452 = vmul.f32 %v451, 1.442695
    %v453 = vpow.pop %v452
    %v454 = vadd.f32 %v453, 1.0
    %v455 = vrcp.pop %v454
    %v456 = vmul.f32 %v454, %v455
    %v457 = vsub.f32 1.0, %v456
    %v458 = vmul.f32 %v455, %v457
    %v459 = vadd.f32 %v455, %v458
    %vm460 = vweird.f32 %v454
    %vm461 = vweird.f32 %v455
    %vm462 = vmor %vm460, %vm461
    %v463 = vsel %vm462, %v455, %v459
    %v464 = vand.u32 2147483647, %v454
    %vm465 = vcmp.eq.f32.partialorder %v464, 8.507059e+37
    %v466 = vand.u32 %v454, 2147483648
    %v467 = vor.u32 1.1754944e-38, %v466
    %v468 = vsel %vm465, %v467, %v463
    %v469 = vmul.f32 1.0, %v468
    %s470 = scalar_lea.vmem [#allocation3], 32
    %v471 = vld [vmem:[%s470] sm:$0xff]
    %v472 = vadd.f32 %v445, %v226
    %474 = vrot.lane.b32.xlu0 %v472, 64
    %v475 = vpop.permute.xlu0 %474
    %v477 = vmul.f32 %v469, %v475
    %v478 = vadd.f32 %v471, %v477
    %v479 = vtanh.pop %v478
    %v480 = vsub.f32 1.0, %v469
    %482 = vrot.lane.b32.xlu0 %v479, 32
    %v483 = vpop.permute.xlu0 %482
    %v485 = vmul.f32 %v480, %v483
    %v486 = vmul.f32 %v469, %v427
    %v487 = vadd.f32 %v485, %v486
    %v488 = vpack.c.bf16 %v487, %v487
    %490 = vrot.lane.b32.xlu0 %v488, 96
    %v491 = vpop.permute.xlu0 %490
    %v493 = vsel %vm76, %v491, 0
    %495 = vmatpush.bf16.msra.mxu0 0
    %496 = vmatpush.bf16.msra.mxu0 0
    %497 = vmatpush.bf16.msra.mxu0 0
    %498 = vmatpush.bf16.msra.mxu0 0
    %499 = vmatpush.bf16.msra.mxu0 0
    %500 = vmatpush.bf16.msra.mxu0 0
    %501 = vmatpush.bf16.msra.mxu0 %v182
    %502 = vmatpush.bf16.msra.mxu0 %v181
    %503 = vmatmul.bf16.gmra.mxu0 %v493
    %v504 = vpop.f32.mrf.mxu0
    %v505 = vadd.f32 0.0, %v504
    %v506 = vpop.f32.mrf.mxu0
    %507 = vdwg.mxu0
    %s508 = scalar_lea.vmem [#allocation2], 40
    %v509 = vld [vmem:[%s508] sm:$0xff]
    %v510 = vadd.f32 %v509, %v505
    %v511 = vxor.u32 %v510, 2147483648
    %v512 = vmul.f32 %v511, 1.442695
    %v513 = vpow.pop %v512
    %v514 = vadd.f32 %v513, 1.0
    %v515 = vrcp.pop %v514
    %v516 = vmul.f32 %v514, %v515
    %v517 = vsub.f32 1.0, %v516
    %v518 = vmul.f32 %v515, %v517
    %v519 = vadd.f32 %v515, %v518
    %vm520 = vweird.f32 %v514
    %vm521 = vweird.f32 %v515
    %vm522 = vmor %vm520, %vm521
    %v523 = vsel %vm522, %v515, %v519
    %v524 = vand.u32 2147483647, %v514
    %vm525 = vcmp.eq.f32.partialorder %v524, 8.507059e+37
    %v526 = vand.u32 %v514, 2147483648
    %v527 = vor.u32 1.1754944e-38, %v526
    %v528 = vsel %vm525, %v527, %v523
    %v529 = vmul.f32 1.0, %v528
    %s530 = scalar_lea.vmem [#allocation3], 40
    %v531 = vld [vmem:[%s530] sm:$0xff]
    %v532 = vadd.f32 %v505, %v226
    %534 = vrot.lane.b32.xlu0 %v532, 64
    %v535 = vpop.permute.xlu0 %534
    %v537 = vmul.f32 %v529, %v535
    %v538 = vadd.f32 %v531, %v537
    %v539 = vtanh.pop %v538
    %v540 = vsub.f32 1.0, %v529
    %542 = vrot.lane.b32.xlu0 %v539, 32
    %v543 = vpop.permute.xlu0 %542
    %v545 = vmul.f32 %v540, %v543
    %v546 = vmul.f32 %v529, %v487
    %v547 = vadd.f32 %v545, %v546
    %v548 = vpack.c.bf16 %v547, %v547
    %550 = vrot.lane.b32.xlu0 %v548, 96
    %v551 = vpop.permute.xlu0 %550
    %v553 = vsel %vm76, %v551, 0
    %555 = vmatpush.bf16.msra.mxu0 0
    %556 = vmatpush.bf16.msra.mxu0 0
    %557 = vmatpush.bf16.msra.mxu0 0
    %558 = vmatpush.bf16.msra.mxu0 0
    %559 = vmatpush.bf16.msra.mxu0 0
    %560 = vmatpush.bf16.msra.mxu0 0
    %561 = vmatpush.bf16.msra.mxu0 %v182
    %562 = vmatpush.bf16.msra.mxu0 %v181
    %563 = vmatmul.bf16.gmra.mxu0 %v553
    %v564 = vpop.f32.mrf.mxu0
    %v565 = vadd.f32 0.0, %v564
    %v566 = vpop.f32.mrf.mxu0
    %567 = vdwg.mxu0
    %s568 = scalar_lea.vmem [#allocation2], 48
    %v569 = vld [vmem:[%s568] sm:$0xff]
    %v570 = vadd.f32 %v569, %v565
    %v571 = vxor.u32 %v570, 2147483648
    %v572 = vmul.f32 %v571, 1.442695
    %v573 = vpow.pop %v572
    %v574 = vadd.f32 %v573, 1.0
    %v575 = vrcp.pop %v574
    %v576 = vmul.f32 %v574, %v575
    %v577 = vsub.f32 1.0, %v576
    %v578 = vmul.f32 %v575, %v577
    %v579 = vadd.f32 %v575, %v578
    %vm580 = vweird.f32 %v574
    %vm581 = vweird.f32 %v575
    %vm582 = vmor %vm580, %vm581
    %v583 = vsel %vm582, %v575, %v579
    %v584 = vand.u32 2147483647, %v574
    %vm585 = vcmp.eq.f32.partialorder %v584, 8.507059e+37
    %v586 = vand.u32 %v574, 2147483648
    %v587 = vor.u32 1.1754944e-38, %v586
    %v588 = vsel %vm585, %v587, %v583
    %v589 = vmul.f32 1.0, %v588
    %s590 = scalar_lea.vmem [#allocation3], 48
    %v591 = vld [vmem:[%s590] sm:$0xff]
    %v592 = vadd.f32 %v565, %v226
    %594 = vrot.lane.b32.xlu0 %v592, 64
    %v595 = vpop.permute.xlu0 %594
    %v597 = vmul.f32 %v589, %v595
    %v598 = vadd.f32 %v591, %v597
    %v599 = vtanh.pop %v598
    %v600 = vsub.f32 1.0, %v589
    %602 = vrot.lane.b32.xlu0 %v599, 32
    %v603 = vpop.permute.xlu0 %602
    %v605 = vmul.f32 %v600, %v603
    %v606 = vmul.f32 %v589, %v547
    %v607 = vadd.f32 %v605, %v606
    %v608 = vpack.c.bf16 %v607, %v607
    %610 = vrot.lane.b32.xlu0 %v608, 96
    %v611 = vpop.permute.xlu0 %610
    %v613 = vsel %vm76, %v611, 0
    %615 = vmatpush.bf16.msra.mxu0 0
    %616 = vmatpush.bf16.msra.mxu0 0
    %617 = vmatpush.bf16.msra.mxu0 0
    %618 = vmatpush.bf16.msra.mxu0 0
    %619 = vmatpush.bf16.msra.mxu0 0
    %620 = vmatpush.bf16.msra.mxu0 0
    %621 = vmatpush.bf16.msra.mxu0 %v182
    %622 = vmatpush.bf16.msra.mxu0 %v181
    %623 = vmatmul.bf16.gmra.mxu0 %v613
    %v624 = vpop.f32.mrf.mxu0
    %v625 = vadd.f32 0.0, %v624
    %v626 = vpop.f32.mrf.mxu0
    %627 = vdwg.mxu0
    %s628 = scalar_lea.vmem [#allocation2], 56
    %v629 = vld [vmem:[%s628] sm:$0xff]
    %v630 = vadd.f32 %v629, %v625
    %v631 = vxor.u32 %v630, 2147483648
    %v632 = vmul.f32 %v631, 1.442695
    %v633 = vpow.pop %v632
    %v634 = vadd.f32 %v633, 1.0
    %v635 = vrcp.pop %v634
    %v636 = vmul.f32 %v634, %v635
    %v637 = vsub.f32 1.0, %v636
    %v638 = vmul.f32 %v635, %v637
    %v639 = vadd.f32 %v635, %v638
    %vm640 = vweird.f32 %v634
    %vm641 = vweird.f32 %v635
    %vm642 = vmor %vm640, %vm641
    %v643 = vsel %vm642, %v635, %v639
    %v644 = vand.u32 2147483647, %v634
    %vm645 = vcmp.eq.f32.partialorder %v644, 8.507059e+37
    %v646 = vand.u32 %v634, 2147483648
    %v647 = vor.u32 1.1754944e-38, %v646
    %v648 = vsel %vm645, %v647, %v643
    %v649 = vmul.f32 1.0, %v648
    %s650 = scalar_lea.vmem [#allocation3], 56
    %v651 = vld [vmem:[%s650] sm:$0xff]
    %v652 = vadd.f32 %v625, %v226
    %654 = vrot.lane.b32.xlu0 %v652, 64
    %v655 = vpop.permute.xlu0 %654
    %v657 = vmul.f32 %v649, %v655
    %v658 = vadd.f32 %v651, %v657
    %v659 = vtanh.pop %v658
    %v660 = vsub.f32 1.0, %v649
    %662 = vrot.lane.b32.xlu0 %v659, 32
    %v663 = vpop.permute.xlu0 %662
    %v665 = vmul.f32 %v660, %v663
    %v666 = vmul.f32 %v649, %v607
    %v667 = vadd.f32 %v665, %v666
    %669 = vrot.lane.b32.xlu0 %v667, 96
    %v670 = vpop.permute.xlu0 %669
    %672 = vst.msk [vmem:[#allocation8] sm:$0xff] %vm76, %v670
    %v673 = vld [vmem:[%s5] sm:$0xff]
    %v674 = vld [vmem:[%s5 + $0x8] sm:$0xff]
    %v675 = vld [vmem:[%s5 + $0x10] sm:$0xff]
    %v676 = vld [vmem:[%s5 + $0x18] sm:$0xff]
    %v677 = vperm.slane %v46, 0
    %v678 = vsel %vm76, %v670, 0
    %680 = vmatpush.msra.mxu0 0.0
    %681 = vmatpush.msra.mxu0 0.0
    %682 = vmatpush.msra.mxu0 0.0
    %683 = vmatpush.msra.mxu0 0.0
    %684 = vmatpush.msra.mxu0 0.0
    %685 = vmatpush.msra.mxu0 0.0
    %686 = vmatpush.msra.mxu0 0.0
    %687 = vmatpush.msra.mxu0 0.0
    %688 = vmatpush.msra.mxu0 0.0
    %689 = vmatpush.msra.mxu0 0.0
    %690 = vmatpush.msra.mxu0 0.0
    %691 = vmatpush.msra.mxu0 0.0
    %692 = vmatpush.msra.mxu0 %v676
    %693 = vmatpush.msra.mxu0 %v675
    %694 = vmatpush.msra.mxu0 %v674
    %695 = vmatpush.msra.mxu0 %v673
    %696 = vmatmul.f32.gmra.mxu0 %v678
    %v697 = vpop.f32.mrf.mxu0
    %v698 = vadd.f32 %v677, %v697
    %699 = vdwg.mxu0
    %vm700 = vcmask 130048
    %v701 = vsel %vm700, %v698, -inf
    %702 = vmax.xlane.f32.xlu0 %v701
    %v703 = vpop.xlane.xlu0 %702
    %v704 = vsub.f32 %v698, %v703
    %v705 = vmul.f32 %v704, 1.442695
    %v706 = vpow.pop %v705
    %v707 = vsel %vm700, %v706, 0.0
    %708 = vadd.xlane.f32.xlu0 %v707
    %v709 = vpop.xlane.xlu0 %708
    %v710 = vlog2.pop %v709
    %v711 = vmul.f32 %v710, 0.6931472
    %v712 = vsub.f32 %v704, %v711
    %713 = vst.msk [vmem:[#allocation7] sm:$0xff] %vm700, %v712
    // Predicated region
    $region30: #{tpu_custom_call.1} parent=1 // pred_check
      _
    $region31: #{tpu_custom_call.1} parent=1 // pred_check_branch
      %715 = sbr.rel (0) target = $region33
    $region32: #{tpu_custom_call.1} parent=1 // pred_region
      %717 = vsyncadd [#allocation6], 0
      %s719 = sshll.u32 [#allocation7], 4
      %s720 = int_to_ptr.vmem [resolvable:$true] %s719
      %s721 = sshll.u32 %s6, 4
      %s722 = int_to_ptr.hbm [resolvable:$true] %s721
      %724 = dma.vmem_to_hbm [thread:$0]  %s720, 128, %s722, [#allocation6]
    $region33: #{tpu_custom_call.1} parent=1 // pred_fallthru
      _
    // Predicated region
    $region34: #{tpu_custom_call.1} parent=1 // pred_check
      _
    $region35: #{tpu_custom_call.1} parent=1 // pred_check_branch
      %726 = sbr.rel (0) target = $region37
    $region36: #{tpu_custom_call.1} parent=1 // pred_region
      %728 = vsyncadd [#allocation9], 0
      %s730 = sshll.u32 [#allocation8], 4
      %s731 = int_to_ptr.vmem [resolvable:$true] %s730
      %s732 = sshll.u32 %s7, 4
      %s733 = int_to_ptr.hbm [resolvable:$true] %s732
      %735 = dma.vmem_to_hbm [thread:$0]  %s731, 128, %s733, [#allocation9]
    $region37: #{tpu_custom_call.1} parent=1 // pred_fallthru
      _
    // Predicated region
    $region38: #{tpu_custom_call.1} parent=1 // pred_check
      _
    $region39: #{tpu_custom_call.1} parent=1 // pred_check_branch
      %737 = sbr.rel (0) target = $region41
    $region40: #{tpu_custom_call.1} parent=1 // pred_region
      %739 = dma.done [#allocation6], 128
    $region41: #{tpu_custom_call.1} parent=1 // pred_fallthru
      _
    // Predicated region
    $region42: #{tpu_custom_call.1} parent=1 // pred_check
      _
    $region43: #{tpu_custom_call.1} parent=1 // pred_check_branch
      %741 = sbr.rel (0) target = $region45
    $region44: #{tpu_custom_call.1} parent=1 // pred_region
      %743 = dma.done [#allocation9], 128
    $region45: #{tpu_custom_call.1} parent=1 // pred_fallthru
      _
    %744 = vsyncpa [#allocation5], 1
    %745 = vsyncpa [#allocation6], 1
    %746 = vsyncpa [#allocation9], 1

</llo_original>
